<compile_context>
chip_gen: v5e
topology: v5e:2x2
jax: 0.10.0
libtpu: 0.0.40
codegen_flags: <defaults>
</compile_context>

<pallas_src>
import jax
import jax.numpy as jnp
from jax.experimental import pallas as pl
from jax.experimental.pallas import tpu as pltpu

INPUT_DIM = 30
HIDDEN_DIM = 64
NUM_CLASSES = 2

# Batch rows per grid step for the tiled path (multiple of 8: sublane constraint).
DEFAULT_TILE_B = 16384


def _mlp_kernel(x_ref, w1_ref, b1_ref, w2_ref, b2_ref, o_ref):
    # x arrives in f32 straight from HBM; cast to bf16 right before the MXU dot so no
    # extra HBM pass is spent on a wrapper-side conversion.
    x_bf = x_ref[...].astype(jnp.bfloat16)
    # hidden = sigmoid(x @ W1 + b1); MXU dot with f32 accumulation.
    h = jnp.dot(x_bf, w1_ref[...], preferred_element_type=jnp.float32)
    h = h + b1_ref[...]                                   # (TB, H) + (1, H), f32
    # sigmoid via a single tanh EUP op per element (instead of exp + reciprocal).
    h = 0.5 * (jnp.tanh(0.5 * h) + 1.0)
    # out = hidden @ W2 + b2 (bf16 inputs, f32 accumulate).
    out = jnp.dot(h.astype(jnp.bfloat16), w2_ref[...],
                  preferred_element_type=jnp.float32)
    o_ref[...] = (out + b2_ref[...]).astype(o_ref.dtype)  # (TB, C) + (1, C), f32


def _single_block_call(x, w1_bf, b1_2d, w2_bf, b2_2d):
    """No-grid path: whole arrays as single blocks (any batch size, incl. ragged tail)."""
    b = x.shape[0]
    return pl.pallas_call(
        _mlp_kernel,
        out_shape=jax.ShapeDtypeStruct((b, NUM_CLASSES), jnp.float32),
    )(x, w1_bf, b1_2d, w2_bf, b2_2d)


def logistic_regression_forward(x, w1, b1, w2, b2, *, tile_b=DEFAULT_TILE_B):
    """x: (B, 30); w1: (30, 64); b1: (64,); w2: (64, 2); b2: (2,) -> (B, 2) f32."""
    assert tile_b % 8 == 0, "tile_b must be a multiple of 8 (sublane constraint)"
    B = x.shape[0]
    x = x.astype(jnp.float32)
    # Weights are tiny and VMEM-resident: pre-cast once (negligible).
    w1_bf = w1.astype(jnp.bfloat16)
    w2_bf = w2.astype(jnp.bfloat16)
    b1_2d = b1.reshape(1, HIDDEN_DIM).astype(jnp.float32)
    b2_2d = b2.reshape(1, NUM_CLASSES).astype(jnp.float32)

    if B <= tile_b:
        # Tiny-batch fast path: single full-array block, no grid bookkeeping.
        return _single_block_call(x, w1_bf, b1_2d, w2_bf, b2_2d)

    num_main = B // tile_b
    main_rows = num_main * tile_b

    # Gridded path over the divisible prefix of x (no whole-array padding / copying:
    # the index_map only ever touches the first `num_main` blocks of the full array).
    out_main = pl.pallas_call(
        _mlp_kernel,
        out_shape=jax.ShapeDtypeStruct((main_rows, NUM_CLASSES), jnp.float32),
        grid=(num_main,),
        in_specs=[
            pl.BlockSpec((tile_b, INPUT_DIM), lambda i: (i, 0)),        # x: streamed
            pl.BlockSpec((INPUT_DIM, HIDDEN_DIM), lambda i: (0, 0)),    # W1: resident
            pl.BlockSpec((1, HIDDEN_DIM), lambda i: (0, 0)),            # b1: resident
            pl.BlockSpec((HIDDEN_DIM, NUM_CLASSES), lambda i: (0, 0)),  # W2: resident
            pl.BlockSpec((1, NUM_CLASSES), lambda i: (0, 0)),           # b2: resident
        ],
        out_specs=pl.BlockSpec((tile_b, NUM_CLASSES), lambda i: (i, 0)),
        compiler_params=pltpu.CompilerParams(
            dimension_semantics=("parallel",),
            vmem_limit_bytes=32 * 1024 * 1024,
        ),
    )(x, w1_bf, b1_2d, w2_bf, b2_2d)

    if main_rows == B:
        return out_main

    # Ragged tail (< tile_b rows): cheap single-block call + concat of the tiny outputs.
    out_tail = _single_block_call(x[main_rows:], w1_bf, b1_2d, w2_bf, b2_2d)
    return jnp.concatenate([out_main, out_tail], axis=0)


def init_params(key):
    """Deterministic init mimicking nn.Linear's uniform(-1/sqrt(fan_in), 1/sqrt(fan_in))."""
    k1, k2, k3, k4 = jax.random.split(key, 4)
    bound1 = 1.0 / jnp.sqrt(INPUT_DIM)
    bound2 = 1.0 / jnp.sqrt(HIDDEN_DIM)
    w1 = jax.random.uniform(k1, (INPUT_DIM, HIDDEN_DIM), jnp.float32, -bound1, bound1)
    b1 = jax.random.uniform(k2, (HIDDEN_DIM,), jnp.float32, -bound1, bound1)
    w2 = jax.random.uniform(k3, (HIDDEN_DIM, NUM_CLASSES), jnp.float32, -bound2, bound2)
    b2 = jax.random.uniform(k4, (NUM_CLASSES,), jnp.float32, -bound2, bound2)
    return w1, b1, w2, b2


def _reference(x, w1, b1, w2, b2):
    """Plain-JAX reference with the same bf16-input / f32-accumulate recipe."""
    h = jnp.dot(x.astype(jnp.bfloat16), w1.astype(jnp.bfloat16),
                preferred_element_type=jnp.float32) + b1.astype(jnp.float32)
    h = jax.nn.sigmoid(h)
    out = jnp.dot(h.astype(jnp.bfloat16), w2.astype(jnp.bfloat16),
                  preferred_element_type=jnp.float32) + b2.astype(jnp.float32)
    return out


if __name__ == "__main__":
    key = jax.random.PRNGKey(0)
    k_x1, k_x2, k_x3, k_p = jax.random.split(key, 4)
    w1, b1, w2, b2 = init_params(k_p)

    # 1) Small batch -> no-grid single-block path.
    x_small = jax.random.normal(k_x1, (8, INPUT_DIM), jnp.float32)
    out_small = logistic_regression_forward(x_small, w1, b1, w2, b2)
    jax.block_until_ready(out_small)
    assert out_small.shape == (8, NUM_CLASSES)
    assert jnp.allclose(out_small, _reference(x_small, w1, b1, w2, b2),
                        atol=2e-3, rtol=2e-3)

    # 2) Divisible batch with a small tile -> pure gridded path (grid of 2).
    x_mid = jax.random.normal(k_x2, (64, INPUT_DIM), jnp.float32)
    out_mid = logistic_regression_forward(x_mid, w1, b1, w2, b2, tile_b=32)
    jax.block_until_ready(out_mid)
    assert out_mid.shape == (64, NUM_CLASSES)
    assert jnp.allclose(out_mid, _reference(x_mid, w1, b1, w2, b2),
                        atol=2e-3, rtol=2e-3)

    # 3) Ragged batch (100 rows, tile 32) -> gridded prefix (96) + single-block tail (4).
    x_big = jax.random.normal(k_x3, (100, INPUT_DIM), jnp.float32)
    out_big = logistic_regression_forward(x_big, w1, b1, w2, b2, tile_b=32)
    jax.block_until_ready(out_big)
    assert out_big.shape == (100, NUM_CLASSES)
    assert jnp.allclose(out_big, _reference(x_big, w1, b1, w2, b2),
                        atol=2e-3, rtol=2e-3)

    print("KERNEL_OK")
</pallas_src>

<mosaic_0001>
module attributes {stable_mosaic.version = 11 : i64} {
  func.func @_mlp_kernel(%arg0: memref<8x30xf32, #tpu.memory_space<vmem>>, %arg1: memref<30x64xbf16, #tpu.memory_space<vmem>>, %arg2: memref<1x64xf32, #tpu.memory_space<vmem>>, %arg3: memref<64x2xbf16, #tpu.memory_space<vmem>>, %arg4: memref<1x2xf32, #tpu.memory_space<vmem>>, %arg5: memref<8x2xf32, #tpu.memory_space<vmem>>) attributes {dimension_semantics = [], scalar_prefetch = 0 : i64, scratch_operands = 0 : i64, tpu.core_type = #tpu.core_type<tc>} {
    %c0 = arith.constant 0 : index
    %c0_0 = arith.constant 0 : index
    %0 = vector.load %arg0[%c0, %c0_0] : memref<8x30xf32, #tpu.memory_space<vmem>>, vector<8x30xf32>
    %1 = arith.truncf %0 : vector<8x30xf32> to vector<8x30xbf16>
    %c0_1 = arith.constant 0 : index
    %c0_2 = arith.constant 0 : index
    %2 = vector.load %arg1[%c0_1, %c0_2] : memref<30x64xbf16, #tpu.memory_space<vmem>>, vector<30x64xbf16>
    %cst = arith.constant dense<0.000000e+00> : vector<8x64xf32>
    %3 = tpu.matmul %1, %2, %cst {dimension_numbers = #tpu.dot_dimension_numbers<[1], [0], [0], [1], [0, 0, 1, 1], [], []>} : vector<8x30xbf16>, vector<30x64xbf16>, vector<8x64xf32> -> vector<8x64xf32>
    %c0_3 = arith.constant 0 : index
    %c0_4 = arith.constant 0 : index
    %4 = vector.load %arg2[%c0_3, %c0_4] : memref<1x64xf32, #tpu.memory_space<vmem>>, vector<1x64xf32>
    %5 = vector.broadcast %4 : vector<1x64xf32> to vector<8x64xf32>
    %6 = arith.addf %3, %5 : vector<8x64xf32>
    %cst_5 = arith.constant 5.000000e-01 : f32
    %7 = vector.broadcast %cst_5 : f32 to vector<8x64xf32>
    %8 = arith.mulf %7, %6 : vector<8x64xf32>
    %9 = math.tanh %8 : vector<8x64xf32>
    %cst_6 = arith.constant 1.000000e+00 : f32
    %10 = vector.broadcast %cst_6 : f32 to vector<8x64xf32>
    %11 = arith.addf %9, %10 : vector<8x64xf32>
    %cst_7 = arith.constant 5.000000e-01 : f32
    %12 = vector.broadcast %cst_7 : f32 to vector<8x64xf32>
    %13 = arith.mulf %12, %11 : vector<8x64xf32>
    %14 = arith.truncf %13 : vector<8x64xf32> to vector<8x64xbf16>
    %c0_8 = arith.constant 0 : index
    %c0_9 = arith.constant 0 : index
    %15 = vector.load %arg3[%c0_8, %c0_9] : memref<64x2xbf16, #tpu.memory_space<vmem>>, vector<64x2xbf16>
    %cst_10 = arith.constant dense<0.000000e+00> : vector<8x2xf32>
    %16 = tpu.matmul %14, %15, %cst_10 {dimension_numbers = #tpu.dot_dimension_numbers<[1], [0], [0], [1], [0, 0, 1, 1], [], []>} : vector<8x64xbf16>, vector<64x2xbf16>, vector<8x2xf32> -> vector<8x2xf32>
    %c0_11 = arith.constant 0 : index
    %c0_12 = arith.constant 0 : index
    %17 = vector.load %arg4[%c0_11, %c0_12] : memref<1x2xf32, #tpu.memory_space<vmem>>, vector<1x2xf32>
    %18 = vector.broadcast %17 : vector<1x2xf32> to vector<8x2xf32>
    %19 = arith.addf %16, %18 : vector<8x2xf32>
    %c0_13 = arith.constant 0 : index
    %c0_14 = arith.constant 0 : index
    %20 = vector.load %arg5[%c0_13, %c0_14] : memref<8x2xf32, #tpu.memory_space<vmem>>, vector<8x2xf32>
    tpu.vector_store %arg5[%c0_13, %c0_14], %19 {strides = array<i32>} : memref<8x2xf32, #tpu.memory_space<vmem>>, vector<8x2xf32>,
    return
  }
}

</mosaic_0001>

<llo_original>
// kernel: tpu_custom_call.1
$region0: #{tpu_custom_call.1}
  #allocation0 [shape = 'u32[]', space=smem, size = 0x4, offset = 0x4, fixed_abs, tag = 'smem constant byte address 0x4 - core index']
  #allocation1 [shape = 'u32[72,128]{1,0:T(1,128)}', space=vmem, size = 0x9000, scoped, tag = 'internal scratch']
  %s0 = inlined_call_operand.vmem [shape: f32[8,30], index: 0, kind: input, shape index: {}]
  %s1 = inlined_call_operand.vmem [shape: bf16[30,64], index: 1, kind: input, shape index: {}]
  %s2 = inlined_call_operand.vmem [shape: f32[1,64], index: 2, kind: input, shape index: {}]
  %s3 = inlined_call_operand.vmem [shape: bf16[64,2], index: 3, kind: input, shape index: {}]
  %s4 = inlined_call_operand.vmem [shape: f32[1,2], index: 4, kind: input, shape index: {}]
  %s5 = inlined_call_operand.vmem [shape: f32[8,2], index: 5, kind: output, shape index: {}]
  %s6 = sld [smem:[#allocation0]]
  $region30: #{tpu_custom_call.1} parent=0
    _
  %s8 = ssub.s32 1, %s6
  %s9 = scalar_select 0, %s8, %s6
  // Predicated region
  $region2: #{tpu_custom_call.1} parent=0 // pred_check
    _
  $region3: #{tpu_custom_call.1} parent=0 // pred_check_branch
    %11 = sbr.rel (0) target = $region5
  $region4: #{tpu_custom_call.1} parent=0 // pred_region
    _
  $region5: #{tpu_custom_call.1} parent=0 // pred_fallthru
    _
  // Predicated region
  $region6: #{tpu_custom_call.1} parent=0 // pred_check
    _
  $region7: #{tpu_custom_call.1} parent=0 // pred_check_branch
    %13 = sbr.rel (0) target = $region9
  $region8: #{tpu_custom_call.1} parent=0 // pred_region
    _
  $region9: #{tpu_custom_call.1} parent=0 // pred_fallthru
    _
  // Predicated region
  $region10: #{tpu_custom_call.1} parent=0 // pred_check
    _
  $region11: #{tpu_custom_call.1} parent=0 // pred_check_branch
    %15 = sbr.rel (0) target = $region13
  $region12: #{tpu_custom_call.1} parent=0 // pred_region
    _
  $region13: #{tpu_custom_call.1} parent=0 // pred_fallthru
    _
  // Predicated region
  $region14: #{tpu_custom_call.1} parent=0 // pred_check
    _
  $region15: #{tpu_custom_call.1} parent=0 // pred_check_branch
    %17 = sbr.rel (0) target = $region17
  $region16: #{tpu_custom_call.1} parent=0 // pred_region
    _
  $region17: #{tpu_custom_call.1} parent=0 // pred_fallthru
    _
  // Predicated region
  $region18: #{tpu_custom_call.1} parent=0 // pred_check
    _
  $region19: #{tpu_custom_call.1} parent=0 // pred_check_branch
    %19 = sbr.rel (0) target = $region21
  $region20: #{tpu_custom_call.1} parent=0 // pred_region
    _
  $region21: #{tpu_custom_call.1} parent=0 // pred_fallthru
    _
  %v21 = vld [vmem:[%s0] sm:$0xff]
  %v22 = vpack.c.bf16 %v21, %v21
  %v23 = vld [vmem:[%s1] sm:$0xf]
  %v24 = vld [vmem:[%s1 + $0x4] sm:$0xf]
  %v25 = vld [vmem:[%s1 + $0x8] sm:$0xf]
  %v26 = vld [vmem:[%s1 + $0xc] sm:$0x7]
  %v27 = vld [vmem:[%s2] sm:$0x1]
  %v29 = vperm.slane %v27, 0
  %v35 = vunpack.c.l.b16 %v23
  %v36 = vunpack.c.l.b16 %v24
  %v37 = vunpack.c.l.b16 %v25
  %v38 = vunpack.c.l.b16 %v26
  %v39 = vpack.c.b16 %v36, %v35
  %v40 = vpack.c.b16 %v38, %v37
  %vm42 = vcmask 244736
  %v44 = vsel %vm42, %v22, 0
  %vm46 = vcmask 1046528
  %v48 = vsel %vm46, %v40, 0
  %50 = vmatpush.bf16.msra.mxu0 0
  %51 = vmatpush.bf16.msra.mxu0 0
  %52 = vmatpush.bf16.msra.mxu0 0
  %53 = vmatpush.bf16.msra.mxu0 0
  %54 = vmatpush.bf16.msra.mxu0 0
  %55 = vmatpush.bf16.msra.mxu0 0
  %56 = vmatpush.bf16.msra.mxu0 %v48
  %57 = vmatpush.bf16.msra.mxu0 %v39
  %58 = vmatmul.bf16.gmra.mxu0 %v44
  %v59 = vpop.f32.mrf.mxu0
  %v60 = vadd.f32 %v29, %v59
  %v61 = vpop.f32.mrf.mxu0
  %62 = vdwg.mxu0
  %v63 = vmul.f32 %v60, 0.5
  %v64 = vtanh.pop %v63
  %v65 = vadd.f32 %v64, 1.0
  %v66 = vmul.f32 %v65, 0.5
  %v67 = vpack.c.bf16 %v66, %v66
  %v68 = vld [vmem:[%s3] sm:$0xf]
  %v69 = vld [vmem:[%s3 + $0x4] sm:$0xf]
  %v70 = vld [vmem:[%s3 + $0x8] sm:$0xf]
  %v71 = vld [vmem:[%s3 + $0xc] sm:$0xf]
  %v72 = vld [vmem:[%s3 + $0x10] sm:$0xf]
  %v73 = vld [vmem:[%s3 + $0x14] sm:$0xf]
  %v74 = vld [vmem:[%s3 + $0x18] sm:$0xf]
  %v75 = vld [vmem:[%s3 + $0x1c] sm:$0xf]
  %v76 = vld [vmem:[%s4] sm:$0x1]
  %v78 = vperm.slane %v76, 0
  %v88 = vunpack.c.l.b16 %v68
  %v89 = vunpack.c.l.b16 %v69
  %v90 = vunpack.c.l.b16 %v70
  %v91 = vunpack.c.l.b16 %v71
  %v92 = vunpack.c.l.b16 %v72
  %v93 = vunpack.c.l.b16 %v73
  %v94 = vunpack.c.l.b16 %v74
  %v95 = vunpack.c.l.b16 %v75
  %v96 = vpack.c.b16 %v89, %v88
  %v97 = vpack.c.b16 %v91, %v90
  %v98 = vpack.c.b16 %v93, %v92
  %v99 = vpack.c.b16 %v95, %v94
  %vm104 = vcmask 523264
  %v106 = vsel %vm104, %v67, 0
  %108 = vmatpush.bf16.msra.mxu0 0
  %109 = vmatpush.bf16.msra.mxu0 0
  %110 = vmatpush.bf16.msra.mxu0 0
  %111 = vmatpush.bf16.msra.mxu0 0
  %112 = vmatpush.bf16.msra.mxu0 %v99
  %113 = vmatpush.bf16.msra.mxu0 %v98
  %114 = vmatpush.bf16.msra.mxu0 %v97
  %115 = vmatpush.bf16.msra.mxu0 %v96
  %116 = vmatmul.bf16.gmra.mxu0 %v106
  %v117 = vpop.f32.mrf.mxu0
  %v118 = vadd.f32 %v78, %v117
  %v119 = vpop.f32.mrf.mxu0
  %120 = vdwg.mxu0
  %vm121 = vcmask 15360
  %122 = vst.msk [vmem:[%s5] sm:$0xff] %vm121, %v118
  // Predicated region
  $region22: #{tpu_custom_call.1} parent=0 // pred_check
    _
  $region23: #{tpu_custom_call.1} parent=0 // pred_check_branch
    %124 = sbr.rel (0) target = $region25
  $region24: #{tpu_custom_call.1} parent=0 // pred_region
    _
  $region25: #{tpu_custom_call.1} parent=0 // pred_fallthru
    _
  // Predicated region
  $region26: #{tpu_custom_call.1} parent=0 // pred_check
    _
  $region27: #{tpu_custom_call.1} parent=0 // pred_check_branch
    %126 = sbr.rel (0) target = $region29
  $region28: #{tpu_custom_call.1} parent=0 // pred_region
    _
  $region29: #{tpu_custom_call.1} parent=0 // pred_fallthru
    _

</llo_original>
